<compile_context>
chip_gen: v7x
topology: tpu7x:2x2x1
jax: 0.10.0
libtpu: 0.0.40
codegen_flags: <defaults>
</compile_context>

<pallas_src>
import jax
import jax.numpy as jnp
from jax.experimental import pallas as pl
from jax.experimental.pallas import tpu as pltpu


def _round_up(n, m):
    return ((n + m - 1) // m) * m


def _block_kernel(x_ref, w1_ref, s1_ref, w2_ref, s2_ref, o_ref):
    # NOTE: for a partial trailing batch block, rows past N contain garbage
    # through the matmul/ReLU.  This is row-wise only (no cross-row reduction
    # anywhere in this kernel), and those rows are never written back.

    # ---- Linear1 with BN1 folded: relu(x @ W1' + s1') -----------------------
    y = jnp.dot(x_ref[...].astype(jnp.bfloat16), w1_ref[...],
                preferred_element_type=jnp.float32)      # bf16 MXU, f32 acc
    y = jnp.maximum(y + s1_ref[...], 0.0)                # f32 shift + ReLU
    # dropout: identity (inference)

    # ---- Linear2 with BN2 folded: relu(y @ W2' + s2') -----------------------
    y = jnp.dot(y.astype(jnp.bfloat16), w2_ref[...],
                preferred_element_type=jnp.float32)
    y = jnp.maximum(y + s2_ref[...], 0.0)
    # dropout: identity (inference)

    # ---- residual: re-read x from the resident VMEM buffer (short live range)
    o_ref[...] = (x_ref[...] + y).astype(o_ref.dtype)


def _pick_bn(n_rows, d):
    """Batch-tile rows per grid step.

    Large tiles amortize the ~0.35 us/step pipeline overhead on this HBM-bound
    kernel; the cap keeps (2-deep x + 2-deep out + live f32 temps + weights,
    weights assumed double-buffered) inside a conservative VMEM budget so it
    also fits v7x's 64 MiB physical VMEM per TensorCore.
    """
    budget = 36 * 1024 * 1024
    weight_bytes = 2 * 2 * (d * d * 2 + d * 4)   # 2 layers x 2 bufs (bf16 W + f32 s)
    per_row = 6 * d * 4                          # x(2 bufs) + out(2 bufs) + ~2 f32 temps
    cap = (budget - weight_bytes) // per_row
    cap = max(16, min(2048, cap))
    cap = (cap // 128) * 128 if cap >= 128 else (cap // 16) * 16

    if n_rows > cap:
        return cap
    # Whole batch fits a single tile: split into two steps when each half is
    # still large, so the "parallel" axis shards across v7x's 2 TensorCores.
    half = _round_up(-(-n_rows // 2), 16)
    if half >= 128:
        return min(cap, half)
    # Tiny batch: one exact tile.  bn == full batch dim is always a legal
    # block shape (even when it is not a multiple of 8), so no partial block.
    return n_rows


@jax.jit
def mylinear_stereo_forward(x, params):
    """x: (N, D) float32.  params: dict of weights / biases / BN stats."""
    N, D = x.shape
    eps = 1e-5

    # Fold eval-mode BatchNorm1d + bias into the weights / a single shift:
    #   BN(x @ W^T + b) = x @ (W^T * scale) + ((b - mean) * scale + beta)
    def fold(w, b, gamma, beta, mean, var):
        scale = gamma / jnp.sqrt(var + eps)                       # (D,)
        w_f = (w.T * scale[None, :]).astype(jnp.bfloat16)         # (D_in, D_out)
        s_f = ((b - mean) * scale + beta).reshape(1, D).astype(jnp.float32)
        return w_f, s_f

    w1p, s1p = fold(params["w1"], params["b1"], params["bn1_gamma"],
                    params["bn1_beta"], params["bn1_mean"], params["bn1_var"])
    w2p, s2p = fold(params["w2"], params["b2"], params["bn2_gamma"],
                    params["bn2_beta"], params["bn2_mean"], params["bn2_var"])

    bn = _pick_bn(N, D)
    grid = (pl.cdiv(N, bn),)
    row = lambda i: (i, 0)
    const = lambda i: (0, 0)

    # VMEM footprint (weights assumed double-buffered) + 25% headroom.
    weight_bytes = 2 * 2 * (D * D * 2 + D * 4)
    tile_bytes = 2 * bn * D * 4 * 2              # x + out, double-buffered
    live_bytes = 2 * bn * D * 4                  # f32 intermediates in flight
    footprint = weight_bytes + tile_bytes + live_bytes
    vmem_limit = int(footprint * 1.25) + (1 << 20)
    vmem_limit = max(16 * 1024 * 1024, min(vmem_limit, 48 * 1024 * 1024))

    cost = pl.CostEstimate(
        flops=4 * N * D * D,                               # two (N,D)@(D,D) matmuls
        transcendentals=0,
        bytes_accessed=2 * N * D * 4 + 2 * (D * D * 2 + D * 4),
    )

    out = pl.pallas_call(
        _block_kernel,
        out_shape=jax.ShapeDtypeStruct((N, D), x.dtype),
        grid_spec=pltpu.PrefetchScalarGridSpec(
            num_scalar_prefetch=0,
            grid=grid,
            in_specs=[
                pl.BlockSpec((bn, D), row),     # x, batch-tiled, unpadded
                pl.BlockSpec((D, D), const),    # W1' (bf16, BN folded), grid-invariant
                pl.BlockSpec((1, D), const),    # shift1 (f32)
                pl.BlockSpec((D, D), const),    # W2' (bf16, BN folded)
                pl.BlockSpec((1, D), const),    # shift2 (f32)
            ],
            out_specs=pl.BlockSpec((bn, D), row),
        ),
        compiler_params=pltpu.CompilerParams(
            dimension_semantics=("parallel",),
            vmem_limit_bytes=vmem_limit),
        cost_estimate=cost,
    )(x.astype(jnp.float32), w1p, s1p, w2p, s2p)

    return out


def make_params(key, D):
    ks = jax.random.split(key, 8)
    # Deterministic synthetic parameters (shapes match nn.Linear(D, D) and
    # nn.BatchNorm1d(D) from the module's __init__).
    params = {
        "w1": jax.random.normal(ks[0], (D, D), jnp.float32) * 0.05,
        "b1": jax.random.normal(ks[1], (D,), jnp.float32) * 0.05,
        "w2": jax.random.normal(ks[2], (D, D), jnp.float32) * 0.05,
        "b2": jax.random.normal(ks[3], (D,), jnp.float32) * 0.05,
        "bn1_gamma": 1.0 + 0.1 * jax.random.normal(ks[4], (D,), jnp.float32),
        "bn1_beta": 0.1 * jax.random.normal(ks[5], (D,), jnp.float32),
        "bn1_mean": 0.05 * jnp.arange(D, dtype=jnp.float32) / D,
        "bn1_var": 1.0 + 0.01 * jnp.arange(D, dtype=jnp.float32) / D,
        "bn2_gamma": 1.0 + 0.1 * jax.random.normal(ks[6], (D,), jnp.float32),
        "bn2_beta": 0.1 * jax.random.normal(ks[7], (D,), jnp.float32),
        "bn2_mean": -0.03 * jnp.arange(D, dtype=jnp.float32) / D,
        "bn2_var": 1.0 + 0.02 * jnp.arange(D, dtype=jnp.float32) / D,
    }
    return params


def reference_forward(x, params):
    """Pure-JAX f32 reference matching the PyTorch module in eval mode."""
    eps = 1e-5
    y = x @ params["w1"].T + params["b1"]
    y = (y - params["bn1_mean"]) / jnp.sqrt(params["bn1_var"] + eps)
    y = y * params["bn1_gamma"] + params["bn1_beta"]
    y = jnp.maximum(y, 0.0)
    y = y @ params["w2"].T + params["b2"]
    y = (y - params["bn2_mean"]) / jnp.sqrt(params["bn2_var"] + eps)
    y = y * params["bn2_gamma"] + params["bn2_beta"]
    y = jnp.maximum(y, 0.0)
    return x + y


if __name__ == "__main__":
    key = jax.random.PRNGKey(0)
    k_x, k_p = jax.random.split(key)

    N, D = 8, 32                      # batch=8, linear_size=32
    x = jax.random.normal(k_x, (N, D), jnp.float32)
    params = make_params(k_p, D)

    out = mylinear_stereo_forward(x, params)
    out = jax.block_until_ready(out)

    ref = reference_forward(x, params)
    assert out.shape == (N, D)
    # bf16 matmul operands (f32 accumulation) vs f32 reference -> loose tol.
    assert jnp.allclose(out, ref, atol=2e-2, rtol=2e-2), "mismatch vs reference"

    print("KERNEL_OK")
</pallas_src>

<mosaic_0001>
module attributes {stable_mosaic.version = 11 : i64} {
  func.func @_block_kernel(%arg0: i32, %arg1: memref<8x32xf32, #tpu.memory_space<vmem>>, %arg2: memref<32x32xbf16, #tpu.memory_space<vmem>>, %arg3: memref<1x32xf32, #tpu.memory_space<vmem>>, %arg4: memref<32x32xbf16, #tpu.memory_space<vmem>>, %arg5: memref<1x32xf32, #tpu.memory_space<vmem>>, %arg6: memref<8x32xf32, #tpu.memory_space<vmem>>) attributes {dimension_semantics = [#tpu.dimension_semantics<parallel>], iteration_bounds = array<i64: 1>, scalar_prefetch = 0 : i64, scratch_operands = 0 : i64, tpu.core_type = #tpu.core_type<tc>, window_params = [{transform_indices = @transform_0, window_bounds = array<i64: 8, 32>}, {pipeline_mode = #tpu.pipeline_mode<synchronous>, transform_indices = @transform_1, window_bounds = array<i64: 32, 32>}, {pipeline_mode = #tpu.pipeline_mode<synchronous>, transform_indices = @transform_2, window_bounds = array<i64: 1, 32>}, {pipeline_mode = #tpu.pipeline_mode<synchronous>, transform_indices = @transform_3, window_bounds = array<i64: 32, 32>}, {pipeline_mode = #tpu.pipeline_mode<synchronous>, transform_indices = @transform_4, window_bounds = array<i64: 1, 32>}, {transform_indices = @transform_5, window_bounds = array<i64: 8, 32>}]} {
    %c0 = arith.constant 0 : index
    %c0_0 = arith.constant 0 : index
    %0 = vector.load %arg1[%c0, %c0_0] : memref<8x32xf32, #tpu.memory_space<vmem>>, vector<8x32xf32>
    %1 = arith.truncf %0 : vector<8x32xf32> to vector<8x32xbf16>
    %c0_1 = arith.constant 0 : index
    %c0_2 = arith.constant 0 : index
    %2 = vector.load %arg2[%c0_1, %c0_2] : memref<32x32xbf16, #tpu.memory_space<vmem>>, vector<32x32xbf16>
    %cst = arith.constant dense<0.000000e+00> : vector<8x32xf32>
    %3 = tpu.matmul %1, %2, %cst {dimension_numbers = #tpu.dot_dimension_numbers<[1], [0], [0], [1], [0, 0, 1, 1], [], []>} : vector<8x32xbf16>, vector<32x32xbf16>, vector<8x32xf32> -> vector<8x32xf32>
    %c0_3 = arith.constant 0 : index
    %c0_4 = arith.constant 0 : index
    %4 = vector.load %arg3[%c0_3, %c0_4] : memref<1x32xf32, #tpu.memory_space<vmem>>, vector<1x32xf32>
    %5 = vector.broadcast %4 : vector<1x32xf32> to vector<8x32xf32>
    %6 = arith.addf %3, %5 : vector<8x32xf32>
    %cst_5 = arith.constant 0.000000e+00 : f32
    %7 = vector.broadcast %cst_5 : f32 to vector<8x32xf32>
    %8 = arith.maximumf %6, %7 : vector<8x32xf32>
    %9 = arith.truncf %8 : vector<8x32xf32> to vector<8x32xbf16>
    %c0_6 = arith.constant 0 : index
    %c0_7 = arith.constant 0 : index
    %10 = vector.load %arg4[%c0_6, %c0_7] : memref<32x32xbf16, #tpu.memory_space<vmem>>, vector<32x32xbf16>
    %cst_8 = arith.constant dense<0.000000e+00> : vector<8x32xf32>
    %11 = tpu.matmul %9, %10, %cst_8 {dimension_numbers = #tpu.dot_dimension_numbers<[1], [0], [0], [1], [0, 0, 1, 1], [], []>} : vector<8x32xbf16>, vector<32x32xbf16>, vector<8x32xf32> -> vector<8x32xf32>
    %c0_9 = arith.constant 0 : index
    %c0_10 = arith.constant 0 : index
    %12 = vector.load %arg5[%c0_9, %c0_10] : memref<1x32xf32, #tpu.memory_space<vmem>>, vector<1x32xf32>
    %13 = vector.broadcast %12 : vector<1x32xf32> to vector<8x32xf32>
    %14 = arith.addf %11, %13 : vector<8x32xf32>
    %cst_11 = arith.constant 0.000000e+00 : f32
    %15 = vector.broadcast %cst_11 : f32 to vector<8x32xf32>
    %16 = arith.maximumf %14, %15 : vector<8x32xf32>
    %c0_12 = arith.constant 0 : index
    %c0_13 = arith.constant 0 : index
    %17 = vector.load %arg1[%c0_12, %c0_13] : memref<8x32xf32, #tpu.memory_space<vmem>>, vector<8x32xf32>
    %18 = arith.addf %17, %16 : vector<8x32xf32>
    %c0_14 = arith.constant 0 : index
    %c0_15 = arith.constant 0 : index
    %19 = vector.load %arg6[%c0_14, %c0_15] : memref<8x32xf32, #tpu.memory_space<vmem>>, vector<8x32xf32>
    tpu.vector_store %arg6[%c0_14, %c0_15], %18 {strides = array<i32>} : memref<8x32xf32, #tpu.memory_space<vmem>>, vector<8x32xf32>,
    return
  }
  func.func @transform_0(%arg0: i32) -> (i32, i32) {
    %c0_i32 = arith.constant 0 : i32
    %c0_i32_0 = arith.constant 0 : i32
    return %arg0, %c0_i32 : i32, i32
  }
  func.func @transform_1(%arg0: i32) -> (i32, i32) {
    %c0_i32 = arith.constant 0 : i32
    %c0_i32_0 = arith.constant 0 : i32
    %c0_i32_1 = arith.constant 0 : i32
    return %c0_i32, %c0_i32_0 : i32, i32
  }
  func.func @transform_2(%arg0: i32) -> (i32, i32) {
    %c0_i32 = arith.constant 0 : i32
    %c0_i32_0 = arith.constant 0 : i32
    %c0_i32_1 = arith.constant 0 : i32
    return %c0_i32, %c0_i32_0 : i32, i32
  }
  func.func @transform_3(%arg0: i32) -> (i32, i32) {
    %c0_i32 = arith.constant 0 : i32
    %c0_i32_0 = arith.constant 0 : i32
    %c0_i32_1 = arith.constant 0 : i32
    return %c0_i32, %c0_i32_0 : i32, i32
  }
  func.func @transform_4(%arg0: i32) -> (i32, i32) {
    %c0_i32 = arith.constant 0 : i32
    %c0_i32_0 = arith.constant 0 : i32
    %c0_i32_1 = arith.constant 0 : i32
    return %c0_i32, %c0_i32_0 : i32, i32
  }
  func.func @transform_5(%arg0: i32) -> (i32, i32) {
    %c0_i32 = arith.constant 0 : i32
    %c0_i32_0 = arith.constant 0 : i32
    return %arg0, %c0_i32 : i32, i32
  }
}

</mosaic_0001>

<llo_original>
// kernel: mylinear_stereo_forward.1
$region0: #{mylinear_stereo_forward.1}
  #allocation0 [shape = 'u32[]', space=smem, size = 0x4, offset = 0x4, fixed_abs, tag = 'smem constant byte address 0x4 - core index']
  #allocation1 [shape = 'u32[144,128]{1,0:T(1,128)}', space=vmem, size = 0x12000, scoped, tag = 'internal scratch']
  %s0 = inlined_call_operand.vmem [shape: f32[8,32], index: 0, kind: input, shape index: {}]
  %s1 = inlined_call_operand.vmem [shape: bf16[32,32], index: 1, kind: input, shape index: {}]
  %s2 = inlined_call_operand.vmem [shape: f32[1,32], index: 2, kind: input, shape index: {}]
  %s3 = inlined_call_operand.vmem [shape: bf16[32,32], index: 3, kind: input, shape index: {}]
  %s4 = inlined_call_operand.vmem [shape: f32[1,32], index: 4, kind: input, shape index: {}]
  %s5 = inlined_call_operand.hbm [shape: f32[8,32], index: 5, kind: output, shape index: {}]
  %s6 = sld [smem:[#allocation0]]
  $region30: #{mylinear_stereo_forward.1} parent=0
    _
  %s8 = ssub.s32 1, %s6
  %s9 = scalar_select 0, %s8, %s6
  $region1: #{mylinear_stereo_forward.1} parent=0
    #allocation2 [shape = 'u8[4096]{0}', space=vmem, size = 0x1000, scoped, tag = 'output window, operand 0, single buffered']
    #allocation3 [shape = 's32[1]{0}', space=sflag, size = 0x4, scoped, tag = 'scoped memory for mylinear_stereo_forward.1']
    %10 = vsyncpa [#allocation3], 0
    // Predicated region
    $region2: #{mylinear_stereo_forward.1} parent=1 // pred_check
      _
    $region3: #{mylinear_stereo_forward.1} parent=1 // pred_check_branch
      %12 = sbr.rel (0) target = $region5
    $region4: #{mylinear_stereo_forward.1} parent=1 // pred_region
      _
    $region5: #{mylinear_stereo_forward.1} parent=1 // pred_fallthru
      _
    // Predicated region
    $region6: #{mylinear_stereo_forward.1} parent=1 // pred_check
      _
    $region7: #{mylinear_stereo_forward.1} parent=1 // pred_check_branch
      %14 = sbr.rel (0) target = $region9
    $region8: #{mylinear_stereo_forward.1} parent=1 // pred_region
      _
    $region9: #{mylinear_stereo_forward.1} parent=1 // pred_fallthru
      _
    // Predicated region
    $region10: #{mylinear_stereo_forward.1} parent=1 // pred_check
      _
    $region11: #{mylinear_stereo_forward.1} parent=1 // pred_check_branch
      %16 = sbr.rel (0) target = $region13
    $region12: #{mylinear_stereo_forward.1} parent=1 // pred_region
      _
    $region13: #{mylinear_stereo_forward.1} parent=1 // pred_fallthru
      _
    // Predicated region
    $region14: #{mylinear_stereo_forward.1} parent=1 // pred_check
      _
    $region15: #{mylinear_stereo_forward.1} parent=1 // pred_check_branch
      %18 = sbr.rel (0) target = $region17
    $region16: #{mylinear_stereo_forward.1} parent=1 // pred_region
      _
    $region17: #{mylinear_stereo_forward.1} parent=1 // pred_fallthru
      _
    // Predicated region
    $region18: #{mylinear_stereo_forward.1} parent=1 // pred_check
      _
    $region19: #{mylinear_stereo_forward.1} parent=1 // pred_check_branch
      %20 = sbr.rel (0) target = $region21
    $region20: #{mylinear_stereo_forward.1} parent=1 // pred_region
      _
    $region21: #{mylinear_stereo_forward.1} parent=1 // pred_fallthru
      _
    %v22 = vld [vmem:[%s0] sm:$0xff]
    %v23 = vpack.c.bf16 %v22, %v22
    %v24 = vld [vmem:[%s1] sm:$0xf]
    %v25 = vld [vmem:[%s1 + $0x4] sm:$0xf]
    %v26 = vld [vmem:[%s1 + $0x8] sm:$0xf]
    %v27 = vld [vmem:[%s1 + $0xc] sm:$0xf]
    %v28 = vld [vmem:[%s2] sm:$0x1]
    %v30 = vlaneseq
    %v31 = vshrl.u32 %v30, 7
    %v32 = vsub.s32 0, %v31
    %v33 = vrot.slane %v28, %v32
    %v39 = vunpack.c.l.b16 %v24
    %v40 = vunpack.c.l.b16 %v25
    %v41 = vunpack.c.l.b16 %v26
    %v42 = vunpack.c.l.b16 %v27
    %v43 = vpack.c.b16 %v40, %v39
    %v44 = vpack.c.b16 %v42, %v41
    %vm47 = vcmask 261120
    %v49 = vsel %vm47, %v23, 0
    %51 = vmatprep.subr.bf16.mxu0 0
    %52 = vmatpush1.bf16.msra.mxu0 %v43
    %53 = vmatprep.subr.bf16.mxu0 0
    %54 = vmatpush1.bf16.msra.mxu0 %v44
    %55 = vmatprep.subr.bf16.mxu0 0
    %56 = vmatpush1.bf16.msra.mxu0 0
    %57 = vmatprep.subr.bf16.mxu0 0
    %58 = vmatpush1.bf16.msra.mxu0 0
    %59 = vmatprep.subr.bf16.mxu0 0
    %60 = vmatpush1.bf16.msra.mxu0 0
    %61 = vmatprep.subr.bf16.mxu0 0
    %62 = vmatpush1.bf16.msra.mxu0 0
    %63 = vmatprep.subr.bf16.mxu0 0
    %64 = vmatpush1.bf16.msra.mxu0 0
    %65 = vmatprep.subr.bf16.mxu0 0
    %66 = vmatpush1.bf16.msra.mxu0 0
    %67 = vmatprep.subr.bf16.mxu0 0
    %68 = vmatpush1.bf16.msra.mxu0 0
    %69 = vmatprep.subr.bf16.mxu0 0
    %70 = vmatpush1.bf16.msra.mxu0 0
    %71 = vmatprep.subr.bf16.mxu0 0
    %72 = vmatpush1.bf16.msra.mxu0 0
    %73 = vmatprep.subr.bf16.mxu0 0
    %74 = vmatpush1.bf16.msra.mxu0 0
    %75 = vmatprep.subr.bf16.mxu0 0
    %76 = vmatpush1.bf16.msra.mxu0 0
    %77 = vmatprep.subr.bf16.mxu0 0
    %78 = vmatpush1.bf16.msra.mxu0 0
    %79 = vmatprep.subr.bf16.mxu0 0
    %80 = vmatpush1.bf16.msra.mxu0 0
    %81 = vmatprep.subr.bf16.mxu0 0
    %82 = vmatpush1.bf16.msra.mxu0 0
    %83 = vmatprep.mubr.bf16.mxu0 0
    %84 = vmatmul.mubr.bf16.gmra.mrb[0].mxu0 %v49
    %v85 = vpop.f32.mrb[0].mxu0
    %v86 = vadd.f32 %v33, %v85
    %v87 = vpop.f32.mrb[0].mxu0
    %v88 = vpop.f32.mrb[0].mxu0
    %v89 = vpop.f32.mrb[0].mxu0
    %90 = vdwg.mxu0
    %v91 = vmax.f32 %v86, 0.0
    %v92 = vpack.c.bf16 %v91, %v91
    %v93 = vld [vmem:[%s3] sm:$0xf]
    %v94 = vld [vmem:[%s3 + $0x4] sm:$0xf]
    %v95 = vld [vmem:[%s3 + $0x8] sm:$0xf]
    %v96 = vld [vmem:[%s3 + $0xc] sm:$0xf]
    %v97 = vld [vmem:[%s4] sm:$0x1]
    %v99 = vlaneseq
    %v100 = vshrl.u32 %v99, 7
    %v101 = vsub.s32 0, %v100
    %v102 = vrot.slane %v97, %v101
    %v108 = vunpack.c.l.b16 %v93
    %v109 = vunpack.c.l.b16 %v94
    %v110 = vunpack.c.l.b16 %v95
    %v111 = vunpack.c.l.b16 %v96
    %v112 = vpack.c.b16 %v109, %v108
    %v113 = vpack.c.b16 %v111, %v110
    %v117 = vsel %vm47, %v92, 0
    %119 = vmatprep.subr.bf16.mxu0 0
    %120 = vmatpush1.bf16.msra.mxu0 %v112
    %121 = vmatprep.subr.bf16.mxu0 0
    %122 = vmatpush1.bf16.msra.mxu0 %v113
    %123 = vmatprep.subr.bf16.mxu0 0
    %124 = vmatpush1.bf16.msra.mxu0 0
    %125 = vmatprep.subr.bf16.mxu0 0
    %126 = vmatpush1.bf16.msra.mxu0 0
    %127 = vmatprep.subr.bf16.mxu0 0
    %128 = vmatpush1.bf16.msra.mxu0 0
    %129 = vmatprep.subr.bf16.mxu0 0
    %130 = vmatpush1.bf16.msra.mxu0 0
    %131 = vmatprep.subr.bf16.mxu0 0
    %132 = vmatpush1.bf16.msra.mxu0 0
    %133 = vmatprep.subr.bf16.mxu0 0
    %134 = vmatpush1.bf16.msra.mxu0 0
    %135 = vmatprep.subr.bf16.mxu0 0
    %136 = vmatpush1.bf16.msra.mxu0 0
    %137 = vmatprep.subr.bf16.mxu0 0
    %138 = vmatpush1.bf16.msra.mxu0 0
    %139 = vmatprep.subr.bf16.mxu0 0
    %140 = vmatpush1.bf16.msra.mxu0 0
    %141 = vmatprep.subr.bf16.mxu0 0
    %142 = vmatpush1.bf16.msra.mxu0 0
    %143 = vmatprep.subr.bf16.mxu0 0
    %144 = vmatpush1.bf16.msra.mxu0 0
    %145 = vmatprep.subr.bf16.mxu0 0
    %146 = vmatpush1.bf16.msra.mxu0 0
    %147 = vmatprep.subr.bf16.mxu0 0
    %148 = vmatpush1.bf16.msra.mxu0 0
    %149 = vmatprep.subr.bf16.mxu0 0
    %150 = vmatpush1.bf16.msra.mxu0 0
    %151 = vmatprep.mubr.bf16.mxu0 0
    %152 = vmatmul.mubr.bf16.gmra.mrb[0].mxu0 %v117
    %v153 = vpop.f32.mrb[0].mxu0
    %v154 = vadd.f32 %v102, %v153
    %v155 = vpop.f32.mrb[0].mxu0
    %v156 = vpop.f32.mrb[0].mxu0
    %v157 = vpop.f32.mrb[0].mxu0
    %158 = vdwg.mxu0
    %v159 = vmax.f32 %v154, 0.0
    %v160 = vadd.f32 %v22, %v159
    %161 = vst.msk [vmem:[#allocation2] sm:$0xff] %vm47, %v160
    // Predicated region
    $region22: #{mylinear_stereo_forward.1} parent=1 // pred_check
      _
    $region23: #{mylinear_stereo_forward.1} parent=1 // pred_check_branch
      %163 = sbr.rel (0) target = $region25
    $region24: #{mylinear_stereo_forward.1} parent=1 // pred_region
      %s165 = ssub.s32 128, 128
      %166 = vsyncadd [#allocation3], %s165
      %s168 = sshll.u32 [#allocation2], 4
      %s169 = int_to_ptr.vmem [resolvable:$true] %s168
      %171 = dma.vmem_to_hbm [thread:$0]  %s169, 128, %s5, [#allocation3]
    $region25: #{mylinear_stereo_forward.1} parent=1 // pred_fallthru
      _
    // Predicated region
    $region26: #{mylinear_stereo_forward.1} parent=1 // pred_check
      _
    $region27: #{mylinear_stereo_forward.1} parent=1 // pred_check_branch
      %173 = sbr.rel (0) target = $region29
    $region28: #{mylinear_stereo_forward.1} parent=1 // pred_region
      %174 = dma.done [#allocation3], 128
    $region29: #{mylinear_stereo_forward.1} parent=1 // pred_fallthru
      _
    %175 = vsyncpa [#allocation3], 1

</llo_original>
